<compile_context>
chip_gen: v6e
topology: v6e:2x2x1
jax: 0.10.0
libtpu: 0.0.40
codegen_flags: <defaults>
</compile_context>

<pallas_src>
import functools

import numpy as np
import jax
import jax.numpy as jnp
from jax import lax
from jax.experimental import pallas as pl
from jax.experimental.pallas import tpu as pltpu

EXPANSION = 4
BN_EPS = 1e-5


def bottleneck_kernel(x_ref, w1_ref, b1_ref, w2_ref, b2_ref, w3_ref, b3_ref,
                      o_ref, *, H):
    rows = x_ref.shape[1]          # wt * H  (W-major flattened spatial rows)
    P = w1_ref.shape[1]            # planes

    x = x_ref[0]                   # (rows, Cin) f32 — kept in f32 for the residual
    xb = x.astype(jnp.bfloat16)

    # conv1 (1x1, BN scale pre-folded into weights) + bias + relu
    h1 = jnp.dot(xb, w1_ref[...], preferred_element_type=jnp.float32)     # (rows, P)
    h1 = jnp.maximum(h1 + b1_ref[0], 0.0)

    # conv2: kernel (3,1), padding (1,0) -> conv along H only.
    # Single fused MXU call: weight is the 3 taps concatenated on the output
    # axis (P, 3P).  Tap k=0 multiplies in[h-1], k=1 in[h], k=2 in[h+1].
    a = jnp.dot(h1.astype(jnp.bfloat16), w2_ref[...],
                preferred_element_type=jnp.float32)                       # (rows, 3P)
    t0 = a[:, 0:P]
    t1 = a[:, P:2 * P]
    t2 = a[:, 2 * P:3 * P]

    # Zero-padded +-1 row shifts along H.  Rows are W-major (r = w*H + h), so a
    # +-1 row shift is a +-1 shift in h; rows that would cross a w boundary
    # (h==0 for the h-1 tap, h==H-1 for the h+1 tap) are the zero padding.
    h_idx = lax.broadcasted_iota(jnp.int32, (rows, P), 0) % H
    zrow = jnp.zeros((1, P), jnp.float32)
    t0s = jnp.concatenate([zrow, t0[:rows - 1, :]], axis=0)   # out[r] += t0[r-1]
    t0s = jnp.where(h_idx == 0, 0.0, t0s)
    t2s = jnp.concatenate([t2[1:, :], zrow], axis=0)          # out[r] += t2[r+1]
    t2s = jnp.where(h_idx == H - 1, 0.0, t2s)
    h2 = jnp.maximum(t1 + t0s + t2s + b2_ref[0], 0.0)         # (rows, P)

    # conv3 (1x1) + bias
    h3 = jnp.dot(h2.astype(jnp.bfloat16), w3_ref[...],
                 preferred_element_type=jnp.float32)          # (rows, 4P)
    h3 = h3 + b3_ref[0]

    # residual add (f32) + relu   (downsample is None => residual is x itself)
    o_ref[0] = jnp.maximum(h3 + x, 0.0)


def fold_bn(gamma, beta, mean, var, eps=BN_EPS):
    scale = gamma / jnp.sqrt(var + eps)
    bias = beta - mean * scale
    return scale, bias


def _pick_wt(W, H, max_rows=1024):
    """Largest divisor of W such that a tile of wt*H rows stays small."""
    best = 1
    for cand in range(1, W + 1):
        if W % cand == 0 and cand * H <= max_rows:
            best = cand
    return best


def bottleneck_pallas(x_nchw, params, wt=None):
    """x_nchw: (N, Cin, H, W) float32 with Cin == 4*planes (downsample=None)."""
    N, Cin, H, W = x_nchw.shape
    P = params["w1_t"].shape[0]                 # planes
    Cout = P * EXPANSION
    assert Cin == Cout, "downsample=None requires inplanes == planes * 4"

    if wt is None:
        wt = _pick_wt(W, H)
    assert W % wt == 0

    # ---- parameter preparation (plain JAX glue, trace-time) ----
    s1, b1 = fold_bn(*params["bn1"])
    s2, b2 = fold_bn(*params["bn2"])
    s3, b3 = fold_bn(*params["bn3"])

    # Fold BN scales into the conv weights; cast weights to bf16 for the MXU.
    w1 = (params["w1_t"][:, :, 0, 0].T * s1[None, :]).astype(jnp.bfloat16)     # (Cin, P)
    w2 = jnp.concatenate(
        [params["w2_t"][:, :, k, 0].T * s2[None, :] for k in range(3)],
        axis=1).astype(jnp.bfloat16)                                           # (P, 3P)
    w3 = (params["w3_t"][:, :, 0, 0].T * s3[None, :]).astype(jnp.bfloat16)     # (P, 4P)
    b1 = b1.reshape(1, P).astype(jnp.float32)
    b2 = b2.reshape(1, P).astype(jnp.float32)
    b3 = b3.reshape(1, Cout).astype(jnp.float32)

    # NCHW -> (N, W, H, C) -> W-major flattened rows (N, W*H, C).
    x_rows = jnp.transpose(x_nchw, (0, 3, 2, 1)).reshape(N, W * H, Cin)

    grid = (N, W // wt)
    const = lambda shape: pl.BlockSpec(shape, lambda n, w: (0,) * len(shape))

    out_rows = pl.pallas_call(
        functools.partial(bottleneck_kernel, H=H),
        out_shape=jax.ShapeDtypeStruct((N, W * H, Cout), jnp.float32),
        grid=grid,
        in_specs=[
            pl.BlockSpec((1, wt * H, Cin), lambda n, w: (n, w, 0)),   # x tile
            const((Cin, P)),                                          # w1 (bf16)
            const((1, P)),                                            # bn1 bias
            const((P, 3 * P)),                                        # w2 taps (bf16)
            const((1, P)),                                            # bn2 bias
            const((P, Cout)),                                         # w3 (bf16)
            const((1, Cout)),                                         # bn3 bias
        ],
        out_specs=pl.BlockSpec((1, wt * H, Cout), lambda n, w: (n, w, 0)),
        compiler_params=pltpu.CompilerParams(
            dimension_semantics=("parallel", "parallel")),
    )(x_rows, w1, b1, w2, b2, w3, b3)

    # rows -> (N, W, H, C) -> NCHW
    return jnp.transpose(out_rows.reshape(N, W, H, Cout), (0, 3, 2, 1))


def bottleneck_reference(x_nchw, params):
    """Pure-JAX f32 reference replicating the PyTorch module (eval-mode BN)."""
    dn = ("NCHW", "OIHW", "NCHW")
    s1, b1 = fold_bn(*params["bn1"])
    s2, b2 = fold_bn(*params["bn2"])
    s3, b3 = fold_bn(*params["bn3"])
    h = lax.conv_general_dilated(x_nchw, params["w1_t"], (1, 1),
                                 [(0, 0), (0, 0)], dimension_numbers=dn)
    h = jnp.maximum(h * s1[None, :, None, None] + b1[None, :, None, None], 0.0)
    h = lax.conv_general_dilated(h, params["w2_t"], (1, 1),
                                 [(1, 1), (0, 0)], dimension_numbers=dn)
    h = jnp.maximum(h * s2[None, :, None, None] + b2[None, :, None, None], 0.0)
    h = lax.conv_general_dilated(h, params["w3_t"], (1, 1),
                                 [(0, 0), (0, 0)], dimension_numbers=dn)
    h = h * s3[None, :, None, None] + b3[None, :, None, None]
    return jnp.maximum(h + x_nchw, 0.0)


def init_params(key, inplanes, planes):
    cout = planes * EXPANSION
    ks = jax.random.split(key, 8)

    def bn_init(k, c):
        k1, k2, k3, k4 = jax.random.split(k, 4)
        gamma = 1.0 + 0.1 * jax.random.normal(k1, (c,), jnp.float32)
        beta = 0.1 * jax.random.normal(k2, (c,), jnp.float32)
        mean = 0.1 * jax.random.normal(k3, (c,), jnp.float32)
        var = jax.random.uniform(k4, (c,), jnp.float32, 0.5, 1.5)
        return gamma, beta, mean, var

    return {
        "w1_t": jax.random.normal(ks[0], (planes, inplanes, 1, 1), jnp.float32)
                * (1.0 / np.sqrt(inplanes)),
        "w2_t": jax.random.normal(ks[1], (planes, planes, 3, 1), jnp.float32)
                * (1.0 / np.sqrt(3 * planes)),
        "w3_t": jax.random.normal(ks[2], (cout, planes, 1, 1), jnp.float32)
                * (1.0 / np.sqrt(planes)),
        "bn1": bn_init(ks[3], planes),
        "bn2": bn_init(ks[4], planes),
        "bn3": bn_init(ks[5], cout),
    }


if __name__ == "__main__":
    # NOTE: this demo config (P=4, Cin=16) is a functional test; real ResNet
    # channel counts (>=128) are what make the last dim lane-dense / MXU-full.
    planes = 4
    inplanes = planes * EXPANSION   # 16, required so the residual add is valid
    N, H, W = 2, 16, 16

    key = jax.random.PRNGKey(0)
    kx, kp = jax.random.split(key)
    x = jax.random.normal(kx, (N, inplanes, H, W), jnp.float32)
    params = init_params(kp, inplanes, planes)

    # wt=8 -> grid (2, 2): exercises the spatial-tiled path.
    out = jax.block_until_ready(bottleneck_pallas(x, params, wt=8))
    ref = jax.block_until_ready(bottleneck_reference(x, params))

    # bf16 matmuls vs f32 reference -> relaxed tolerances (per perf review).
    np.testing.assert_allclose(np.asarray(out), np.asarray(ref),
                               rtol=5e-2, atol=5e-2)

    print("KERNEL_OK")
</pallas_src>

<mosaic_0001>
module attributes {stable_mosaic.version = 11 : i64} {
  func.func @bottleneck_kernel(%arg0: i32, %arg1: i32, %arg2: memref<1x128x16xf32, #tpu.memory_space<vmem>>, %arg3: memref<16x4xbf16, #tpu.memory_space<vmem>>, %arg4: memref<1x4xf32, #tpu.memory_space<vmem>>, %arg5: memref<4x12xbf16, #tpu.memory_space<vmem>>, %arg6: memref<1x4xf32, #tpu.memory_space<vmem>>, %arg7: memref<4x16xbf16, #tpu.memory_space<vmem>>, %arg8: memref<1x16xf32, #tpu.memory_space<vmem>>, %arg9: memref<1x128x16xf32, #tpu.memory_space<vmem>>) attributes {dimension_semantics = [#tpu.dimension_semantics<parallel>, #tpu.dimension_semantics<parallel>], iteration_bounds = array<i64: 2, 2>, scalar_prefetch = 0 : i64, scratch_operands = 0 : i64, tpu.core_type = #tpu.core_type<tc>, window_params = [{transform_indices = @transform_0, window_bounds = array<i64: 1, 128, 16>}, {pipeline_mode = #tpu.pipeline_mode<synchronous>, transform_indices = @transform_1, window_bounds = array<i64: 16, 4>}, {pipeline_mode = #tpu.pipeline_mode<synchronous>, transform_indices = @transform_2, window_bounds = array<i64: 1, 4>}, {pipeline_mode = #tpu.pipeline_mode<synchronous>, transform_indices = @transform_3, window_bounds = array<i64: 4, 12>}, {pipeline_mode = #tpu.pipeline_mode<synchronous>, transform_indices = @transform_4, window_bounds = array<i64: 1, 4>}, {pipeline_mode = #tpu.pipeline_mode<synchronous>, transform_indices = @transform_5, window_bounds = array<i64: 4, 16>}, {pipeline_mode = #tpu.pipeline_mode<synchronous>, transform_indices = @transform_6, window_bounds = array<i64: 1, 16>}, {transform_indices = @transform_7, window_bounds = array<i64: 1, 128, 16>}]} {
    %c0 = arith.constant 0 : index
    %c0_0 = arith.constant 0 : index
    %c0_1 = arith.constant 0 : index
    %0 = vector.load %arg2[%c0, %c0_0, %c0_1] : memref<1x128x16xf32, #tpu.memory_space<vmem>>, vector<1x128x16xf32>
    %1 = vector.shape_cast %0 : vector<1x128x16xf32> to vector<128x16xf32>
    %2 = arith.truncf %1 : vector<128x16xf32> to vector<128x16xbf16>
    %c0_2 = arith.constant 0 : index
    %c0_3 = arith.constant 0 : index
    %3 = vector.load %arg3[%c0_2, %c0_3] : memref<16x4xbf16, #tpu.memory_space<vmem>>, vector<16x4xbf16>
    %cst = arith.constant dense<0.000000e+00> : vector<128x4xf32>
    %4 = tpu.matmul %2, %3, %cst {dimension_numbers = #tpu.dot_dimension_numbers<[1], [0], [0], [1], [0, 0, 1, 1], [], []>} : vector<128x16xbf16>, vector<16x4xbf16>, vector<128x4xf32> -> vector<128x4xf32>
    %c0_4 = arith.constant 0 : index
    %c0_5 = arith.constant 0 : index
    %5 = vector.load %arg4[%c0_4, %c0_5] : memref<1x4xf32, #tpu.memory_space<vmem>>, vector<1x4xf32>
    %6 = vector.shape_cast %5 : vector<1x4xf32> to vector<4xf32>
    %7 = vector.shape_cast %6 : vector<4xf32> to vector<1x4xf32>
    %8 = vector.broadcast %7 : vector<1x4xf32> to vector<128x4xf32>
    %9 = arith.addf %4, %8 : vector<128x4xf32>
    %cst_6 = arith.constant 0.000000e+00 : f32
    %10 = vector.broadcast %cst_6 : f32 to vector<128x4xf32>
    %11 = arith.maximumf %9, %10 : vector<128x4xf32>
    %12 = arith.truncf %11 : vector<128x4xf32> to vector<128x4xbf16>
    %c0_7 = arith.constant 0 : index
    %c0_8 = arith.constant 0 : index
    %13 = vector.load %arg5[%c0_7, %c0_8] : memref<4x12xbf16, #tpu.memory_space<vmem>>, vector<4x12xbf16>
    %cst_9 = arith.constant dense<0.000000e+00> : vector<128x12xf32>
    %14 = tpu.matmul %12, %13, %cst_9 {dimension_numbers = #tpu.dot_dimension_numbers<[1], [0], [0], [1], [0, 0, 1, 1], [], []>} : vector<128x4xbf16>, vector<4x12xbf16>, vector<128x12xf32> -> vector<128x12xf32>
    %15 = vector.extract_strided_slice %14 {offsets = [0, 0], sizes = [128, 4], strides = [1, 1]} : vector<128x12xf32> to vector<128x4xf32>
    %16 = vector.extract_strided_slice %14 {offsets = [0, 4], sizes = [128, 4], strides = [1, 1]} : vector<128x12xf32> to vector<128x4xf32>
    %17 = vector.extract_strided_slice %14 {offsets = [0, 8], sizes = [128, 4], strides = [1, 1]} : vector<128x12xf32> to vector<128x4xf32>
    %18 = tpu.iota {dimensions = array<i32: 0>} : vector<128x4xi32>
    %c16_i32 = arith.constant 16 : i32
    %c0_i32 = arith.constant 0 : i32
    %19 = arith.cmpi eq, %c16_i32, %c0_i32 : i32
    %c1_i32 = arith.constant 1 : i32
    %20 = arith.select %19, %c1_i32, %c16_i32 : i32
    %21 = vector.broadcast %20 : i32 to vector<128x4xi32>
    %22 = arith.remsi %18, %21 : vector<128x4xi32>
    %c0_i32_10 = arith.constant 0 : i32
    %23 = vector.broadcast %c0_i32_10 : i32 to vector<128x4xi32>
    %24 = arith.cmpi ne, %22, %23 : vector<128x4xi32>
    %c0_i32_11 = arith.constant 0 : i32
    %25 = vector.broadcast %c0_i32_11 : i32 to vector<128x4xi32>
    %26 = arith.cmpi slt, %22, %25 : vector<128x4xi32>
    %c0_i32_12 = arith.constant 0 : i32
    %27 = arith.cmpi slt, %20, %c0_i32_12 : i32
    %28 = vector.broadcast %27 : i1 to vector<128x4xi1>
    %29 = vector.broadcast %28 : vector<128x4xi1> to vector<128x4xi1>
    %30 = arith.xori %26, %29 : vector<128x4xi1>
    %31 = arith.andi %30, %24 : vector<128x4xi1>
    %32 = vector.broadcast %20 : i32 to vector<128x4xi32>
    %33 = arith.addi %22, %32 : vector<128x4xi32>
    %34 = arith.select %31, %33, %22 : vector<128x4xi1>, vector<128x4xi32>
    %cst_13 = arith.constant 0.000000e+00 : f32
    %35 = vector.broadcast %cst_13 : f32 to vector<1x4xf32>
    %36 = vector.extract_strided_slice %15 {offsets = [0, 0], sizes = [127, 4], strides = [1, 1]} : vector<128x4xf32> to vector<127x4xf32>
    %37 = tpu.concatenate %35, %36 in 0 : vector<1x4xf32>, vector<127x4xf32> -> vector<128x4xf32>
    %c0_i32_14 = arith.constant 0 : i32
    %38 = vector.broadcast %c0_i32_14 : i32 to vector<128x4xi32>
    %39 = arith.cmpi eq, %34, %38 : vector<128x4xi32>
    %cst_15 = arith.constant 0.000000e+00 : f32
    %40 = vector.broadcast %cst_15 : f32 to vector<128x4xf32>
    %41 = arith.select %39, %40, %37 : vector<128x4xi1>, vector<128x4xf32>
    %42 = vector.extract_strided_slice %17 {offsets = [1, 0], sizes = [127, 4], strides = [1, 1]} : vector<128x4xf32> to vector<127x4xf32>
    %43 = tpu.concatenate %42, %35 in 0 : vector<127x4xf32>, vector<1x4xf32> -> vector<128x4xf32>
    %c15_i32 = arith.constant 15 : i32
    %44 = vector.broadcast %c15_i32 : i32 to vector<128x4xi32>
    %45 = arith.cmpi eq, %34, %44 : vector<128x4xi32>
    %cst_16 = arith.constant 0.000000e+00 : f32
    %46 = vector.broadcast %cst_16 : f32 to vector<128x4xf32>
    %47 = arith.select %45, %46, %43 : vector<128x4xi1>, vector<128x4xf32>
    %48 = arith.addf %16, %41 : vector<128x4xf32>
    %49 = arith.addf %48, %47 : vector<128x4xf32>
    %c0_17 = arith.constant 0 : index
    %c0_18 = arith.constant 0 : index
    %50 = vector.load %arg6[%c0_17, %c0_18] : memref<1x4xf32, #tpu.memory_space<vmem>>, vector<1x4xf32>
    %51 = vector.shape_cast %50 : vector<1x4xf32> to vector<4xf32>
    %52 = vector.shape_cast %51 : vector<4xf32> to vector<1x4xf32>
    %53 = vector.broadcast %52 : vector<1x4xf32> to vector<128x4xf32>
    %54 = arith.addf %49, %53 : vector<128x4xf32>
    %cst_19 = arith.constant 0.000000e+00 : f32
    %55 = vector.broadcast %cst_19 : f32 to vector<128x4xf32>
    %56 = arith.maximumf %54, %55 : vector<128x4xf32>
    %57 = arith.truncf %56 : vector<128x4xf32> to vector<128x4xbf16>
    %c0_20 = arith.constant 0 : index
    %c0_21 = arith.constant 0 : index
    %58 = vector.load %arg7[%c0_20, %c0_21] : memref<4x16xbf16, #tpu.memory_space<vmem>>, vector<4x16xbf16>
    %cst_22 = arith.constant dense<0.000000e+00> : vector<128x16xf32>
    %59 = tpu.matmul %57, %58, %cst_22 {dimension_numbers = #tpu.dot_dimension_numbers<[1], [0], [0], [1], [0, 0, 1, 1], [], []>} : vector<128x4xbf16>, vector<4x16xbf16>, vector<128x16xf32> -> vector<128x16xf32>
    %c0_23 = arith.constant 0 : index
    %c0_24 = arith.constant 0 : index
    %60 = vector.load %arg8[%c0_23, %c0_24] : memref<1x16xf32, #tpu.memory_space<vmem>>, vector<1x16xf32>
    %61 = vector.shape_cast %60 : vector<1x16xf32> to vector<16xf32>
    %62 = vector.shape_cast %61 : vector<16xf32> to vector<1x16xf32>
    %63 = vector.broadcast %62 : vector<1x16xf32> to vector<128x16xf32>
    %64 = arith.addf %59, %63 : vector<128x16xf32>
    %65 = arith.addf %64, %1 : vector<128x16xf32>
    %cst_25 = arith.constant 0.000000e+00 : f32
    %66 = vector.broadcast %cst_25 : f32 to vector<128x16xf32>
    %67 = arith.maximumf %65, %66 : vector<128x16xf32>
    %c0_26 = arith.constant 0 : index
    %c0_27 = arith.constant 0 : index
    %c0_28 = arith.constant 0 : index
    %68 = vector.load %arg9[%c0_26, %c0_27, %c0_28] : memref<1x128x16xf32, #tpu.memory_space<vmem>>, vector<1x128x16xf32>
    %69 = vector.shape_cast %68 : vector<1x128x16xf32> to vector<128x16xf32>
    %70 = vector.shape_cast %67 : vector<128x16xf32> to vector<1x128x16xf32>
    tpu.vector_store %arg9[%c0_26, %c0_27, %c0_28], %70 {strides = array<i32>} : memref<1x128x16xf32, #tpu.memory_space<vmem>>, vector<1x128x16xf32>,
    return
  }
  func.func @transform_0(%arg0: i32, %arg1: i32) -> (i32, i32, i32) {
    %c0_i32 = arith.constant 0 : i32
    %c0_i32_0 = arith.constant 0 : i32
    return %arg0, %arg1, %c0_i32 : i32, i32, i32
  }
  func.func @transform_1(%arg0: i32, %arg1: i32) -> (i32, i32) {
    %c0_i32 = arith.constant 0 : i32
    %c0_i32_0 = arith.constant 0 : i32
    %c0_i32_1 = arith.constant 0 : i32
    return %c0_i32, %c0_i32_0 : i32, i32
  }
  func.func @transform_2(%arg0: i32, %arg1: i32) -> (i32, i32) {
    %c0_i32 = arith.constant 0 : i32
    %c0_i32_0 = arith.constant 0 : i32
    %c0_i32_1 = arith.constant 0 : i32
    return %c0_i32, %c0_i32_0 : i32, i32
  }
  func.func @transform_3(%arg0: i32, %arg1: i32) -> (i32, i32) {
    %c0_i32 = arith.constant 0 : i32
    %c0_i32_0 = arith.constant 0 : i32
    %c0_i32_1 = arith.constant 0 : i32
    return %c0_i32, %c0_i32_0 : i32, i32
  }
  func.func @transform_4(%arg0: i32, %arg1: i32) -> (i32, i32) {
    %c0_i32 = arith.constant 0 : i32
    %c0_i32_0 = arith.constant 0 : i32
    %c0_i32_1 = arith.constant 0 : i32
    return %c0_i32, %c0_i32_0 : i32, i32
  }
  func.func @transform_5(%arg0: i32, %arg1: i32) -> (i32, i32) {
    %c0_i32 = arith.constant 0 : i32
    %c0_i32_0 = arith.constant 0 : i32
    %c0_i32_1 = arith.constant 0 : i32
    return %c0_i32, %c0_i32_0 : i32, i32
  }
  func.func @transform_6(%arg0: i32, %arg1: i32) -> (i32, i32) {
    %c0_i32 = arith.constant 0 : i32
    %c0_i32_0 = arith.constant 0 : i32
    %c0_i32_1 = arith.constant 0 : i32
    return %c0_i32, %c0_i32_0 : i32, i32
  }
  func.func @transform_7(%arg0: i32, %arg1: i32) -> (i32, i32, i32) {
    %c0_i32 = arith.constant 0 : i32
    %c0_i32_0 = arith.constant 0 : i32
    return %arg0, %arg1, %c0_i32 : i32, i32, i32
  }
}

</mosaic_0001>

<llo_original>
// kernel: tpu_custom_call.1
$region0: #{tpu_custom_call.1}
  #allocation0 [shape = 'u32[]', space=smem, size = 0x4, offset = 0x4, fixed_abs, tag = 'smem constant byte address 0x4 - core index']
  #allocation1 [shape = 'u32[144,128]{1,0:T(1,128)}', space=vmem, size = 0x12000, scoped, tag = 'internal scratch']
  %s0 = inlined_call_operand.vmem [shape: f32[2,256,16], index: 0, kind: input, shape index: {}]
  %s1 = inlined_call_operand.vmem [shape: bf16[16,4], index: 1, kind: input, shape index: {}]
  %s2 = inlined_call_operand.vmem [shape: f32[1,4], index: 2, kind: input, shape index: {}]
  %s3 = inlined_call_operand.vmem [shape: bf16[4,12], index: 3, kind: input, shape index: {}]
  %s4 = inlined_call_operand.vmem [shape: f32[1,4], index: 4, kind: input, shape index: {}]
  %s5 = inlined_call_operand.vmem [shape: bf16[4,16], index: 5, kind: input, shape index: {}]
  %s6 = inlined_call_operand.vmem [shape: f32[1,16], index: 6, kind: input, shape index: {}]
  %s7 = inlined_call_operand.vmem [shape: f32[2,256,16], index: 7, kind: output, shape index: {}]
  %s8 = sld [smem:[#allocation0]]
  $region61: #{tpu_custom_call.1} parent=0
    _
  %s10 = ssub.s32 1, %s8
  %s11 = scalar_select 0, %s10, %s8
  loop: start=0, step=1, limit=6
  $region2: #{tpu_custom_call.1} parent=0 // loop_pre_header
    _
  $region3: #{tpu_custom_call.1} parent=0 // loop_header
    %s13 = sphi 0, %s17
    %p14 = scmp.ge.s32.totalorder %s13, 6
    %s20 = sphi 0, %s32
    %s21 = sphi 0, %s28
    %s22 = sphi 0, %s20
    %s23 = sphi 0, %s21
    %s24 = sphi 0, %s22
    %s25 = sphi 0, %s23
    %s37 = sphi 0, %s39
    %s40 = sphi 0, %s37
    %s41 = sphi 0, %s40
    %s57 = sphi 0, %s41
    %s61 = sphi 0, %s61
    %s63 = sphi 0, %s61
    %s64 = sphi 0, %s63
    %s78 = sphi 0, %s64
    %s82 = sphi 0, %s82
    %s84 = sphi 0, %s82
    %s85 = sphi 0, %s84
    %s99 = sphi 0, %s85
    %s103 = sphi 0, %s103
    %s105 = sphi 0, %s103
    %s106 = sphi 0, %s105
    %s120 = sphi 0, %s106
    %s124 = sphi 0, %s124
    %s126 = sphi 0, %s124
    %s127 = sphi 0, %s126
    %s141 = sphi 0, %s127
    %s145 = sphi 0, %s145
    %s147 = sphi 0, %s145
    %s148 = sphi 0, %s147
    %s162 = sphi 0, %s148
    %s166 = sphi 0, %s166
    %s168 = sphi 0, %s166
    %s169 = sphi 0, %s168
    %s183 = sphi 0, %s169
    %s191 = sphi 0, %s193
    %s194 = sphi 0, %s191
    %s195 = sphi 0, %s194
    %s211 = sphi 0, %s195
  $region4: #{tpu_custom_call.1} parent=0 // loop_header_branch
    %16 = sbr.rel (%p14) target = $region8
  $region5: #{tpu_custom_call.1} parent=0 // loop_body
    %s18 = ssub.s32 %s13, 1
    %s19 = ssub.s32 %s13, 2
    %s26 = sadd.s32 1, %s21
    %p27 = scmp.ge.s32.totalorder %s26, 2
    %s28 = scalar_select %p27, 0, %s26
    %s29 = sadd.s32 1, %s20
    %s30 = scalar_select %p27, %s29, %s20
    %p31 = scmp.ge.s32.totalorder %s30, 2
    %s32 = scalar_select %p31, 0, %s30
    %s33 = ssub.s32 %s20, %s32
    %s34 = ssub.s32 %s21, %s28
    %s35 = sor.u32 %s33, %s34
    %p36 = scmp.eq.s32.totalorder %s35, 0
    %s38 = sadd.s32 %s37, 1
    %s39 = scalar_select %p36, %s37, %s38
    %p42 = pneg %p36
    %p43 = scmp.eq.s32.totalorder %s13, 3
    %p44 = por %p42, %p43
    %p45 = scmp.ne.s32.totalorder %s37, %s40
    %p46 = scmp.eq.s32.totalorder %s13, 0
    %p47 = por %p45, %p46
    %p48 = scmp.ne.s32.totalorder %s37, %s40
    %p49 = scmp.eq.s32.totalorder %s18, 3
    %p50 = por %p48, %p49
    %p51 = scmp.ne.s32.totalorder %s40, %s41
    %p52 = scmp.eq.s32.totalorder %s18, 0
    %p53 = por %p51, %p52
    %p54 = scmp.ne.s32.totalorder %s40, %s41
    %p55 = scmp.eq.s32.totalorder %s19, 3
    %p56 = por %p54, %p55
    %p58 = scmp.ne.s32.totalorder %s41, %s57
    %p59 = scmp.eq.s32.totalorder %s19, 0
    %p60 = por %p58, %p59
    %s62 = sadd.s32 %s61, 1
    %p65 = scmp.eq.s32.totalorder %s13, 3
    %p66 = scmp.ne.s32.totalorder %s61, %s63
    %p67 = scmp.eq.s32.totalorder %s13, 0
    %p68 = por %p66, %p67
    %p69 = scmp.ne.s32.totalorder %s61, %s63
    %p70 = scmp.eq.s32.totalorder %s18, 3
    %p71 = por %p69, %p70
    %p72 = scmp.ne.s32.totalorder %s63, %s64
    %p73 = scmp.eq.s32.totalorder %s18, 0
    %p74 = por %p72, %p73
    %p75 = scmp.ne.s32.totalorder %s63, %s64
    %p76 = scmp.eq.s32.totalorder %s19, 3
    %p77 = por %p75, %p76
    %p79 = scmp.ne.s32.totalorder %s64, %s78
    %p80 = scmp.eq.s32.totalorder %s19, 0
    %p81 = por %p79, %p80
    %s83 = sadd.s32 %s82, 1
    %p86 = scmp.eq.s32.totalorder %s13, 3
    %p87 = scmp.ne.s32.totalorder %s82, %s84
    %p88 = scmp.eq.s32.totalorder %s13, 0
    %p89 = por %p87, %p88
    %p90 = scmp.ne.s32.totalorder %s82, %s84
    %p91 = scmp.eq.s32.totalorder %s18, 3
    %p92 = por %p90, %p91
    %p93 = scmp.ne.s32.totalorder %s84, %s85
    %p94 = scmp.eq.s32.totalorder %s18, 0
    %p95 = por %p93, %p94
    %p96 = scmp.ne.s32.totalorder %s84, %s85
    %p97 = scmp.eq.s32.totalorder %s19, 3
    %p98 = por %p96, %p97
    %p100 = scmp.ne.s32.totalorder %s85, %s99
    %p101 = scmp.eq.s32.totalorder %s19, 0
    %p102 = por %p100, %p101
    %s104 = sadd.s32 %s103, 1
    %p107 = scmp.eq.s32.totalorder %s13, 3
    %p108 = scmp.ne.s32.totalorder %s103, %s105
    %p109 = scmp.eq.s32.totalorder %s13, 0
    %p110 = por %p108, %p109
    %p111 = scmp.ne.s32.totalorder %s103, %s105
    %p112 = scmp.eq.s32.totalorder %s18, 3
    %p113 = por %p111, %p112
    %p114 = scmp.ne.s32.totalorder %s105, %s106
    %p115 = scmp.eq.s32.totalorder %s18, 0
    %p116 = por %p114, %p115
    %p117 = scmp.ne.s32.totalorder %s105, %s106
    %p118 = scmp.eq.s32.totalorder %s19, 3
    %p119 = por %p117, %p118
    %p121 = scmp.ne.s32.totalorder %s106, %s120
    %p122 = scmp.eq.s32.totalorder %s19, 0
    %p123 = por %p121, %p122
    %s125 = sadd.s32 %s124, 1
    %p128 = scmp.eq.s32.totalorder %s13, 3
    %p129 = scmp.ne.s32.totalorder %s124, %s126
    %p130 = scmp.eq.s32.totalorder %s13, 0
    %p131 = por %p129, %p130
    %p132 = scmp.ne.s32.totalorder %s124, %s126
    %p133 = scmp.eq.s32.totalorder %s18, 3
    %p134 = por %p132, %p133
    %p135 = scmp.ne.s32.totalorder %s126, %s127
    %p136 = scmp.eq.s32.totalorder %s18, 0
    %p137 = por %p135, %p136
    %p138 = scmp.ne.s32.totalorder %s126, %s127
    %p139 = scmp.eq.s32.totalorder %s19, 3
    %p140 = por %p138, %p139
    %p142 = scmp.ne.s32.totalorder %s127, %s141
    %p143 = scmp.eq.s32.totalorder %s19, 0
    %p144 = por %p142, %p143
    %s146 = sadd.s32 %s145, 1
    %p149 = scmp.eq.s32.totalorder %s13, 3
    %p150 = scmp.ne.s32.totalorder %s145, %s147
    %p151 = scmp.eq.s32.totalorder %s13, 0
    %p152 = por %p150, %p151
    %p153 = scmp.ne.s32.totalorder %s145, %s147
    %p154 = scmp.eq.s32.totalorder %s18, 3
    %p155 = por %p153, %p154
    %p156 = scmp.ne.s32.totalorder %s147, %s148
    %p157 = scmp.eq.s32.totalorder %s18, 0
    %p158 = por %p156, %p157
    %p159 = scmp.ne.s32.totalorder %s147, %s148
    %p160 = scmp.eq.s32.totalorder %s19, 3
    %p161 = por %p159, %p160
    %p163 = scmp.ne.s32.totalorder %s148, %s162
    %p164 = scmp.eq.s32.totalorder %s19, 0
    %p165 = por %p163, %p164
    %s167 = sadd.s32 %s166, 1
    %p170 = scmp.eq.s32.totalorder %s13, 3
    %p171 = scmp.ne.s32.totalorder %s166, %s168
    %p172 = scmp.eq.s32.totalorder %s13, 0
    %p173 = por %p171, %p172
    %p174 = scmp.ne.s32.totalorder %s166, %s168
    %p175 = scmp.eq.s32.totalorder %s18, 3
    %p176 = por %p174, %p175
    %p177 = scmp.ne.s32.totalorder %s168, %s169
    %p178 = scmp.eq.s32.totalorder %s18, 0
    %p179 = por %p177, %p178
    %p180 = scmp.ne.s32.totalorder %s168, %s169
    %p181 = scmp.eq.s32.totalorder %s19, 3
    %p182 = por %p180, %p181
    %p184 = scmp.ne.s32.totalorder %s169, %s183
    %p185 = scmp.eq.s32.totalorder %s19, 0
    %p186 = por %p184, %p185
    %s187 = ssub.s32 %s20, %s32
    %s188 = ssub.s32 %s21, %s28
    %s189 = sor.u32 %s187, %s188
    %p190 = scmp.eq.s32.totalorder %s189, 0
    %s192 = sadd.s32 %s191, 1
    %s193 = scalar_select %p190, %s191, %s192
    %p196 = pneg %p190
    %p197 = scmp.eq.s32.totalorder %s13, 3
    %p198 = por %p196, %p197
    %p199 = scmp.ne.s32.totalorder %s191, %s194
    %p200 = scmp.eq.s32.totalorder %s13, 0
    %p201 = por %p199, %p200
    %p202 = scmp.ne.s32.totalorder %s191, %s194
    %p203 = scmp.eq.s32.totalorder %s18, 3
    %p204 = por %p202, %p203
    %p205 = scmp.ne.s32.totalorder %s194, %s195
    %p206 = scmp.eq.s32.totalorder %s18, 0
    %p207 = por %p205, %p206
    %p208 = scmp.ne.s32.totalorder %s194, %s195
    %p209 = scmp.eq.s32.totalorder %s19, 3
    %p210 = por %p208, %p209
    %p212 = scmp.ne.s32.totalorder %s195, %s211
    %p213 = scmp.eq.s32.totalorder %s19, 0
    %p214 = por %p212, %p213
    %p215 = scmp.le.s32.totalorder 1, %s13
    %p216 = scmp.lt.s32.totalorder %s13, 5
    %p217 = pnand %p215, %p216
    %p218 = pneg %p217
    // Predicated region
    $region9: #{tpu_custom_call.1} parent=5 // pred_check
      _
    $region10: #{tpu_custom_call.1} parent=5 // pred_check_branch
      %220 = sbr.rel (%p217) target = $region12
    $region11: #{tpu_custom_call.1} parent=5 // pred_region
      %s221 = ssub.s32 %s13, 1
      // Predicated region
      $region13: #{tpu_custom_call.1} parent=11 // pred_check
        %p222 = pneg %p74
      $region14: #{tpu_custom_call.1} parent=11 // pred_check_branch
        %224 = sbr.rel (%p222) target = $region16
      $region15: #{tpu_custom_call.1} parent=11 // pred_region
        _
      $region16: #{tpu_custom_call.1} parent=11 // pred_fallthru
        _
      // Predicated region
      $region17: #{tpu_custom_call.1} parent=11 // pred_check
        %p225 = pneg %p95
      $region18: #{tpu_custom_call.1} parent=11 // pred_check_branch
        %227 = sbr.rel (%p225) target = $region20
      $region19: #{tpu_custom_call.1} parent=11 // pred_region
        _
      $region20: #{tpu_custom_call.1} parent=11 // pred_fallthru
        _
      // Predicated region
      $region21: #{tpu_custom_call.1} parent=11 // pred_check
        %p228 = pneg %p116
      $region22: #{tpu_custom_call.1} parent=11 // pred_check_branch
        %230 = sbr.rel (%p228) target = $region24
      $region23: #{tpu_custom_call.1} parent=11 // pred_region
        _
      $region24: #{tpu_custom_call.1} parent=11 // pred_fallthru
        _
      // Predicated region
      $region25: #{tpu_custom_call.1} parent=11 // pred_check
        %p231 = pneg %p137
      $region26: #{tpu_custom_call.1} parent=11 // pred_check_branch
        %233 = sbr.rel (%p231) target = $region28
      $region27: #{tpu_custom_call.1} parent=11 // pred_region
        _
      $region28: #{tpu_custom_call.1} parent=11 // pred_fallthru
        _
      // Predicated region
      $region29: #{tpu_custom_call.1} parent=11 // pred_check
        %p234 = pneg %p158
      $region30: #{tpu_custom_call.1} parent=11 // pred_check_branch
        %236 = sbr.rel (%p234) target = $region32
      $region31: #{tpu_custom_call.1} parent=11 // pred_region
        _
      $region32: #{tpu_custom_call.1} parent=11 // pred_fallthru
        _
      // Predicated region
      $region33: #{tpu_custom_call.1} parent=11 // pred_check
        %p237 = pneg %p179
      $region34: #{tpu_custom_call.1} parent=11 // pred_check_branch
        %239 = sbr.rel (%p237) target = $region36
      $region35: #{tpu_custom_call.1} parent=11 // pred_region
        _
      $region36: #{tpu_custom_call.1} parent=11 // pred_fallthru
        _
    $region12: #{tpu_custom_call.1} parent=5 // pred_fallthru
      _
    %p240 = scmp.lt.s32.totalorder %s13, 4
    // Predicated region
    $region37: #{tpu_custom_call.1} parent=5 // pred_check
      %p241 = pneg %p240
    $region38: #{tpu_custom_call.1} parent=5 // pred_check_branch
      %243 = sbr.rel (%p241) target = $region40
    $region39: #{tpu_custom_call.1} parent=5 // pred_region
      // Predicated region
      $region41: #{tpu_custom_call.1} parent=39 // pred_check
        %p244 = pneg %p47
      $region42: #{tpu_custom_call.1} parent=39 // pred_check_branch
        %246 = sbr.rel (%p244) target = $region44
      $region43: #{tpu_custom_call.1} parent=39 // pred_region
        %s247 = smul.u32 16, %s21
        %p248 = scmp.lt.s32.totalorder %s20, 1
        %s249 = scalar_select %p248, %s20, 1
        %p250 = scmp.lt.s32.totalorder %s247, 31
        %s251 = scalar_select %p250, %s247, 31
        %s252 = smul.addr %s249, 32
        %s253 = sadd.s32 %s251, %s252
        %s254 = smul.addr %s253, 8
        %s255 = scalar_lea.vmem %s0, %s254
        %s256 = smul.u32 16, %s21
      $region44: #{tpu_custom_call.1} parent=39 // pred_fallthru
        _
    $region40: #{tpu_custom_call.1} parent=5 // pred_fallthru
      _
    %p257 = scmp.le.s32.totalorder 1, %s13
    %p258 = scmp.lt.s32.totalorder %s13, 5
    %p259 = pnand %p257, %p258
    %p260 = pneg %p259
    // Predicated region
    $region45: #{tpu_custom_call.1} parent=5 // pred_check
      _
    $region46: #{tpu_custom_call.1} parent=5 // pred_check_branch
      %262 = sbr.rel (%p259) target = $region48
    $region47: #{tpu_custom_call.1} parent=5 // pred_region
      %s263 = ssub.s32 %s13, 1
      %s264 = smul.u32 16, %s23
      %p265 = scmp.lt.s32.totalorder %s22, 1
      %s266 = scalar_select %p265, %s22, 1
      %p267 = scmp.lt.s32.totalorder %s264, 31
      %s268 = scalar_select %p267, %s264, 31
      %s269 = smul.addr %s266, 32
      %s270 = sadd.s32 %s268, %s269
      %s271 = smul.addr %s270, 8
      %s272 = scalar_lea.vmem %s0, %s271
      %p273 = pneg %p53
      %p274 = pneg %p50
      %p275 = pneg %p74
      %p276 = pneg %p71
      %p277 = pneg %p95
      %p278 = pneg %p92
      %p279 = pneg %p116
      %p280 = pneg %p113
      %p281 = pneg %p137
      %p282 = pneg %p134
      %p283 = pneg %p158
      %p284 = pneg %p155
      %p285 = pneg %p179
      %p286 = pneg %p176
      %p287 = pneg %p207
      %p288 = pneg %p204
      %s289 = smul.u32 16, %s23
      %p290 = scmp.lt.s32.totalorder %s22, 1
      %s291 = scalar_select %p290, %s22, 1
      %p292 = scmp.lt.s32.totalorder %s289, 31
      %s293 = scalar_select %p292, %s289, 31
      %s294 = smul.addr %s291, 32
      %s295 = sadd.s32 %s293, %s294
      %s296 = smul.addr %s295, 8
      %s297 = scalar_lea.vmem %s7, %s296
      %s298 = smul.u32 16, %s23
      %p299 = scmp.lt.s32.totalorder %s22, 1
      %s300 = scalar_select %p299, %s22, 1
      %p301 = scmp.lt.s32.totalorder %s298, 31
      %s302 = scalar_select %p301, %s298, 31
      %s303 = smul.addr %s300, 32
      %s304 = sadd.s32 %s302, %s303
      %s305 = smul.addr %s304, 8
      %s306 = scalar_lea.vmem %s0, %s305
      %s307 = smul.u32 16, %s23
      %s308 = smul.u32 16, %s23
      %p309 = scmp.lt.s32.totalorder %s22, 1
      %s310 = scalar_select %p309, %s22, 1
      %p311 = scmp.lt.s32.totalorder %s308, 31
      %s312 = scalar_select %p311, %s308, 31
      %s313 = smul.addr %s310, 32
      %s314 = sadd.s32 %s312, %s313
      %s315 = smul.addr %s314, 8
      %s316 = scalar_lea.vmem %s7, %s315
      %s317 = smul.u32 16, %s23
      %v319 = vld [vmem:[%s306] sm:$0xff]
      %v320 = vld [vmem:[%s306 + $0x8] sm:$0xff]
      %v321 = vld [vmem:[%s306 + $0x10] sm:$0xff]
      %v322 = vld [vmem:[%s306 + $0x18] sm:$0xff]
      %v323 = vld [vmem:[%s306 + $0x20] sm:$0xff]
      %v324 = vld [vmem:[%s306 + $0x28] sm:$0xff]
      %v325 = vld [vmem:[%s306 + $0x30] sm:$0xff]
      %v326 = vld [vmem:[%s306 + $0x38] sm:$0xff]
      %v327 = vld [vmem:[%s306 + $0x40] sm:$0xff]
      %v328 = vld [vmem:[%s306 + $0x48] sm:$0xff]
      %v329 = vld [vmem:[%s306 + $0x50] sm:$0xff]
      %v330 = vld [vmem:[%s306 + $0x58] sm:$0xff]
      %v331 = vld [vmem:[%s306 + $0x60] sm:$0xff]
      %v332 = vld [vmem:[%s306 + $0x68] sm:$0xff]
      %v333 = vld [vmem:[%s306 + $0x70] sm:$0xff]
      %v334 = vld [vmem:[%s306 + $0x78] sm:$0xff]
      %v335 = vpack.c.bf16 %v320, %v319
      %v336 = vpack.c.bf16 %v322, %v321
      %v337 = vpack.c.bf16 %v324, %v323
      %v338 = vpack.c.bf16 %v326, %v325
      %v339 = vpack.c.bf16 %v328, %v327
      %v340 = vpack.c.bf16 %v330, %v329
      %v341 = vpack.c.bf16 %v332, %v331
      %v342 = vpack.c.bf16 %v334, %v333
      %v343 = vld [vmem:[%s1] sm:$0xf]
      %v344 = vld [vmem:[%s1 + $0x4] sm:$0xf]
      %v345 = vld [vmem:[%s2] sm:$0x1]
      %v347 = vlaneseq
      %v348 = vshrl.u32 %v347, 7
      %v349 = vsub.s32 0, %v348
      %v350 = vrot.slane %v345, %v349
      %v354 = vunpack.c.l.b16 %v343
      %v355 = vunpack.c.l.b16 %v344
      %v356 = vpack.c.b16 %v355, %v354
      %vm358 = vcmask 130048
      %v360 = vsel %vm358, %v335, 0
      %v363 = vsel %vm358, %v336, 0
      %v366 = vsel %vm358, %v337, 0
      %v369 = vsel %vm358, %v338, 0
      %v372 = vsel %vm358, %v339, 0
      %v375 = vsel %vm358, %v340, 0
      %v378 = vsel %vm358, %v341, 0
      %v381 = vsel %vm358, %v342, 0
      %383 = vmatprep.subr.bf16.mxu0 0
      %384 = vmatpush1.bf16.msra.mxu0 0
      %385 = vmatprep.subr.bf16.mxu0 0
      %386 = vmatpush1.bf16.msra.mxu0 0
      %387 = vmatprep.subr.bf16.mxu0 0
      %388 = vmatpush1.bf16.msra.mxu0 0
      %389 = vmatprep.subr.bf16.mxu0 0
      %390 = vmatpush1.bf16.msra.mxu0 0
      %391 = vmatprep.subr.bf16.mxu0 0
      %392 = vmatpush1.bf16.msra.mxu0 0
      %393 = vmatprep.subr.bf16.mxu0 0
      %394 = vmatpush1.bf16.msra.mxu0 0
      %395 = vmatprep.subr.bf16.mxu0 0
      %396 = vmatpush1.bf16.msra.mxu0 0
      %397 = vmatprep.subr.bf16.mxu0 0
      %398 = vmatpush1.bf16.msra.mxu0 %v356
      %399 = vmatprep.subr.bf16.mxu0 0
      %400 = vmatpush2.bf16.msra.mxu0 0
      %401 = vmatprep.subr.bf16.mxu0 0
      %402 = vmatpush2.bf16.msra.mxu0 0
      %403 = vmatprep.subr.bf16.mxu0 0
      %404 = vmatpush2.bf16.msra.mxu0 0
      %405 = vmatprep.subr.bf16.mxu0 0
      %406 = vmatpush2.bf16.msra.mxu0 0
      %407 = vmatprep.subr.bf16.mxu0 0
      %408 = vmatpush2.bf16.msra.mxu0 0
      %409 = vmatprep.subr.bf16.mxu0 0
      %410 = vmatpush2.bf16.msra.mxu0 0
      %411 = vmatprep.subr.bf16.mxu0 0
      %412 = vmatpush2.bf16.msra.mxu0 0
      %413 = vmatprep.subr.bf16.mxu0 0
      %414 = vmatpush2.bf16.msra.mxu0 0
      %415 = vmatprep.mubr.bf16.mxu0 0
      %416 = vmatmul.mubr.bf16.gmra.mxu0 %v360
      %v417 = vpop.f32.mrf.mxu0
      %v418 = vadd.f32 %v350, %v417
      %v419 = vpop.f32.mrf.mxu0
      %v420 = vpop.f32.mrf.mxu0
      %v421 = vadd.f32 %v350, %v420
      %v422 = vpop.f32.mrf.mxu0
      %423 = vmatprep.mubr.bf16.mxu0 0
      %424 = vmatmul.mubr.bf16.gmra.mxu0 %v363
      %v425 = vpop.f32.mrf.mxu0
      %v426 = vadd.f32 %v350, %v425
      %v427 = vpop.f32.mrf.mxu0
      %v428 = vpop.f32.mrf.mxu0
      %v429 = vadd.f32 %v350, %v428
      %v430 = vpop.f32.mrf.mxu0
      %431 = vmatprep.mubr.bf16.mxu0 0
      %432 = vmatmul.mubr.bf16.gmra.mxu0 %v366
      %v433 = vpop.f32.mrf.mxu0
      %v434 = vadd.f32 %v350, %v433
      %v435 = vpop.f32.mrf.mxu0
      %v436 = vpop.f32.mrf.mxu0
      %v437 = vadd.f32 %v350, %v436
      %v438 = vpop.f32.mrf.mxu0
      %439 = vmatprep.mubr.bf16.mxu0 0
      %440 = vmatmul.mubr.bf16.gmra.mxu0 %v369
      %v441 = vpop.f32.mrf.mxu0
      %v442 = vadd.f32 %v350, %v441
      %v443 = vpop.f32.mrf.mxu0
      %v444 = vpop.f32.mrf.mxu0
      %v445 = vadd.f32 %v350, %v444
      %v446 = vpop.f32.mrf.mxu0
      %447 = vmatprep.mubr.bf16.mxu0 0
      %448 = vmatmul.mubr.bf16.gmra.mxu0 %v372
      %v449 = vpop.f32.mrf.mxu0
      %v450 = vadd.f32 %v350, %v449
      %v451 = vpop.f32.mrf.mxu0
      %v452 = vpop.f32.mrf.mxu0
      %v453 = vadd.f32 %v350, %v452
      %v454 = vpop.f32.mrf.mxu0
      %455 = vmatprep.mubr.bf16.mxu0 0
      %456 = vmatmul.mubr.bf16.gmra.mxu0 %v375
      %v457 = vpop.f32.mrf.mxu0
      %v458 = vadd.f32 %v350, %v457
      %v459 = vpop.f32.mrf.mxu0
      %v460 = vpop.f32.mrf.mxu0
      %v461 = vadd.f32 %v350, %v460
      %v462 = vpop.f32.mrf.mxu0
      %463 = vmatprep.mubr.bf16.mxu0 0
      %464 = vmatmul.mubr.bf16.gmra.mxu0 %v378
      %v465 = vpop.f32.mrf.mxu0
      %v466 = vadd.f32 %v350, %v465
      %v467 = vpop.f32.mrf.mxu0
      %v468 = vpop.f32.mrf.mxu0
      %v469 = vadd.f32 %v350, %v468
      %v470 = vpop.f32.mrf.mxu0
      %471 = vmatprep.mubr.bf16.mxu0 0
      %472 = vmatmul.mubr.bf16.gmra.mxu0 %v381
      %v473 = vpop.f32.mrf.mxu0
      %v474 = vadd.f32 %v350, %v473
      %v475 = vpop.f32.mrf.mxu0
      %v476 = vpop.f32.mrf.mxu0
      %v477 = vadd.f32 %v350, %v476
      %v478 = vpop.f32.mrf.mxu0
      %479 = vdwg.mxu0
      %v480 = vmax.f32 %v418, 0.0
      %v481 = vmax.f32 %v421, 0.0
      %v482 = vmax.f32 %v426, 0.0
      %v483 = vmax.f32 %v429, 0.0
      %v484 = vmax.f32 %v434, 0.0
      %v485 = vmax.f32 %v437, 0.0
      %v486 = vmax.f32 %v442, 0.0
      %v487 = vmax.f32 %v445, 0.0
      %v488 = vmax.f32 %v450, 0.0
      %v489 = vmax.f32 %v453, 0.0
      %v490 = vmax.f32 %v458, 0.0
      %v491 = vmax.f32 %v461, 0.0
      %v492 = vmax.f32 %v466, 0.0
      %v493 = vmax.f32 %v469, 0.0
      %v494 = vmax.f32 %v474, 0.0
      %v495 = vmax.f32 %v477, 0.0
      %v496 = vpack.c.bf16 %v481, %v480
      %v497 = vpack.c.bf16 %v483, %v482
      %v498 = vpack.c.bf16 %v485, %v484
      %v499 = vpack.c.bf16 %v487, %v486
      %v500 = vpack.c.bf16 %v489, %v488
      %v501 = vpack.c.bf16 %v491, %v490
      %v502 = vpack.c.bf16 %v493, %v492
      %v503 = vpack.c.bf16 %v495, %v494
      %v504 = vld [vmem:[%s3] sm:$0x3]
      %vm505 = vcmask 31744
      %v507 = vsel %vm505, %v496, 0
      %v510 = vsel %vm505, %v497, 0
      %v513 = vsel %vm505, %v498, 0
      %v516 = vsel %vm505, %v499, 0
      %v519 = vsel %vm505, %v500, 0
      %v522 = vsel %vm505, %v501, 0
      %v525 = vsel %vm505, %v502, 0
      %v528 = vsel %vm505, %v503, 0
      %vm530 = vcmask 1041408
      %v532 = vsel %vm530, %v504, 0
      %534 = vmatprep.subr.bf16.mxu0 0
      %535 = vmatpush1.bf16.msra.mxu0 0
      %536 = vmatprep.subr.bf16.mxu0 0
      %537 = vmatpush1.bf16.msra.mxu0 0
      %538 = vmatprep.subr.bf16.mxu0 0
      %539 = vmatpush1.bf16.msra.mxu0 0
      %540 = vmatprep.subr.bf16.mxu0 0
      %541 = vmatpush1.bf16.msra.mxu0 0
      %542 = vmatprep.subr.bf16.mxu0 0
      %543 = vmatpush1.bf16.msra.mxu0 0
      %544 = vmatprep.subr.bf16.mxu0 0
      %545 = vmatpush1.bf16.msra.mxu0 0
      %546 = vmatprep.subr.bf16.mxu0 0
      %547 = vmatpush1.bf16.msra.mxu0 0
      %548 = vmatprep.subr.bf16.mxu0 0
      %549 = vmatpush1.bf16.msra.mxu0 %v532
      %550 = vmatprep.subr.bf16.mxu0 0
      %551 = vmatpush2.bf16.msra.mxu0 0
      %552 = vmatprep.subr.bf16.mxu0 0
      %553 = vmatpush2.bf16.msra.mxu0 0
      %554 = vmatprep.subr.bf16.mxu0 0
      %555 = vmatpush2.bf16.msra.mxu0 0
      %556 = vmatprep.subr.bf16.mxu0 0
      %557 = vmatpush2.bf16.msra.mxu0 0
      %558 = vmatprep.subr.bf16.mxu0 0
      %559 = vmatpush2.bf16.msra.mxu0 0
      %560 = vmatprep.subr.bf16.mxu0 0
      %561 = vmatpush2.bf16.msra.mxu0 0
      %562 = vmatprep.subr.bf16.mxu0 0
      %563 = vmatpush2.bf16.msra.mxu0 0
      %564 = vmatprep.subr.bf16.mxu0 0
      %565 = vmatpush2.bf16.msra.mxu0 0
      %566 = vmatprep.mubr.bf16.mxu0 0
      %567 = vmatmul.mubr.bf16.gmra.mxu0 %v507
      %v568 = vpop.f32.mrf.mxu0
      %v569 = vadd.f32 0.0, %v568
      %v570 = vpop.f32.mrf.mxu0
      %v571 = vpop.f32.mrf.mxu0
      %v572 = vadd.f32 0.0, %v571
      %v573 = vpop.f32.mrf.mxu0
      %574 = vmatprep.mubr.bf16.mxu0 0
      %575 = vmatmul.mubr.bf16.gmra.mxu0 %v510
      %v576 = vpop.f32.mrf.mxu0
      %v577 = vadd.f32 0.0, %v576
      %v578 = vpop.f32.mrf.mxu0
      %v579 = vpop.f32.mrf.mxu0
      %v580 = vadd.f32 0.0, %v579
      %v581 = vpop.f32.mrf.mxu0
      %582 = vmatprep.mubr.bf16.mxu0 0
      %583 = vmatmul.mubr.bf16.gmra.mxu0 %v513
      %v584 = vpop.f32.mrf.mxu0
      %v585 = vadd.f32 0.0, %v584
      %v586 = vpop.f32.mrf.mxu0
      %v587 = vpop.f32.mrf.mxu0
      %v588 = vadd.f32 0.0, %v587
      %v589 = vpop.f32.mrf.mxu0
      %590 = vmatprep.mubr.bf16.mxu0 0
      %591 = vmatmul.mubr.bf16.gmra.mxu0 %v516
      %v592 = vpop.f32.mrf.mxu0
      %v593 = vadd.f32 0.0, %v592
      %v594 = vpop.f32.mrf.mxu0
      %v595 = vpop.f32.mrf.mxu0
      %v596 = vadd.f32 0.0, %v595
      %v597 = vpop.f32.mrf.mxu0
      %598 = vmatprep.mubr.bf16.mxu0 0
      %599 = vmatmul.mubr.bf16.gmra.mxu0 %v519
      %v600 = vpop.f32.mrf.mxu0
      %v601 = vadd.f32 0.0, %v600
      %v602 = vpop.f32.mrf.mxu0
      %v603 = vpop.f32.mrf.mxu0
      %v604 = vadd.f32 0.0, %v603
      %v605 = vpop.f32.mrf.mxu0
      %606 = vmatprep.mubr.bf16.mxu0 0
      %607 = vmatmul.mubr.bf16.gmra.mxu0 %v522
      %v608 = vpop.f32.mrf.mxu0
      %v609 = vadd.f32 0.0, %v608
      %v610 = vpop.f32.mrf.mxu0
      %v611 = vpop.f32.mrf.mxu0
      %v612 = vadd.f32 0.0, %v611
      %v613 = vpop.f32.mrf.mxu0
      %614 = vmatprep.mubr.bf16.mxu0 0
      %615 = vmatmul.mubr.bf16.gmra.mxu0 %v525
      %v616 = vpop.f32.mrf.mxu0
      %v617 = vadd.f32 0.0, %v616
      %v618 = vpop.f32.mrf.mxu0
      %v619 = vpop.f32.mrf.mxu0
      %v620 = vadd.f32 0.0, %v619
      %v621 = vpop.f32.mrf.mxu0
      %622 = vmatprep.mubr.bf16.mxu0 0
      %623 = vmatmul.mubr.bf16.gmra.mxu0 %v528
      %v624 = vpop.f32.mrf.mxu0
      %v625 = vadd.f32 0.0, %v624
      %v626 = vpop.f32.mrf.mxu0
      %v627 = vpop.f32.mrf.mxu0
      %v628 = vadd.f32 0.0, %v627
      %v629 = vpop.f32.mrf.mxu0
      %630 = vdwg.mxu0
      %v631 = vlaneseq
      %v632 = vshrl.u32 %v631, 7
      %v633 = vadd.s32 %v632, 8
      %v634 = vadd.s32 %v632, 16
      %v635 = vadd.s32 %v632, 24
      %v636 = vadd.s32 %v632, 32
      %v637 = vadd.s32 %v632, 40
      %v638 = vadd.s32 %v632, 48
      %v639 = vadd.s32 %v632, 56
      %v640 = vadd.s32 %v632, 64
      %v641 = vadd.s32 %v632, 72
      %v642 = vadd.s32 %v632, 80
      %v643 = vadd.s32 %v632, 88
      %v644 = vadd.s32 %v632, 96
      %v645 = vadd.s32 %v632, 104
      %v646 = vadd.s32 %v632, 112
      %v647 = vadd.s32 %v632, 120
      %vm648 = vcmp.lt.s32.totalorder %v632, 0
      %v649 = vsub.s32 0, %v632
      %v650 = vsel %vm648, %v649, %v632
      %v651 = vshrl.u32 %v650, 4
      %v652 = vand.u32 %v650, 15
      %v653 = vsub.s32 0, %v652
      %v654 = vsel %vm648, %v653, %v652
      %vm655 = vcmp.lt.s32.totalorder %v633, 0
      %v656 = vsub.s32 0, %v633
      %v657 = vsel %vm655, %v656, %v633
      %v658 = vshrl.u32 %v657, 4
      %v659 = vand.u32 %v657, 15
      %v660 = vsub.s32 0, %v659
      %v661 = vsel %vm655, %v660, %v659
      %vm662 = vcmp.lt.s32.totalorder %v634, 0
      %v663 = vsub.s32 0, %v634
      %v664 = vsel %vm662, %v663, %v634
      %v665 = vshrl.u32 %v664, 4
      %v666 = vand.u32 %v664, 15
      %v667 = vsub.s32 0, %v666
      %v668 = vsel %vm662, %v667, %v666
      %vm669 = vcmp.lt.s32.totalorder %v635, 0
      %v670 = vsub.s32 0, %v635
      %v671 = vsel %vm669, %v670, %v635
      %v672 = vshrl.u32 %v671, 4
      %v673 = vand.u32 %v671, 15
      %v674 = vsub.s32 0, %v673
      %v675 = vsel %vm669, %v674, %v673
      %vm676 = vcmp.lt.s32.totalorder %v636, 0
      %v677 = vsub.s32 0, %v636
      %v678 = vsel %vm676, %v677, %v636
      %v679 = vshrl.u32 %v678, 4
      %v680 = vand.u32 %v678, 15
      %v681 = vsub.s32 0, %v680
      %v682 = vsel %vm676, %v681, %v680
      %vm683 = vcmp.lt.s32.totalorder %v637, 0
      %v684 = vsub.s32 0, %v637
      %v685 = vsel %vm683, %v684, %v637
      %v686 = vshrl.u32 %v685, 4
      %v687 = vand.u32 %v685, 15
      %v688 = vsub.s32 0, %v687
      %v689 = vsel %vm683, %v688, %v687
      %vm690 = vcmp.lt.s32.totalorder %v638, 0
      %v691 = vsub.s32 0, %v638
      %v692 = vsel %vm690, %v691, %v638
      %v693 = vshrl.u32 %v692, 4
      %v694 = vand.u32 %v692, 15
      %v695 = vsub.s32 0, %v694
      %v696 = vsel %vm690, %v695, %v694
      %vm697 = vcmp.lt.s32.totalorder %v639, 0
      %v698 = vsub.s32 0, %v639
      %v699 = vsel %vm697, %v698, %v639
      %v700 = vshrl.u32 %v699, 4
      %v701 = vand.u32 %v699, 15
      %v702 = vsub.s32 0, %v701
      %v703 = vsel %vm697, %v702, %v701
      %vm704 = vcmp.lt.s32.totalorder %v640, 0
      %v705 = vsub.s32 0, %v640
      %v706 = vsel %vm704, %v705, %v640
      %v707 = vshrl.u32 %v706, 4
      %v708 = vand.u32 %v706, 15
      %v709 = vsub.s32 0, %v708
      %v710 = vsel %vm704, %v709, %v708
      %vm711 = vcmp.lt.s32.totalorder %v641, 0
      %v712 = vsub.s32 0, %v641
      %v713 = vsel %vm711, %v712, %v641
      %v714 = vshrl.u32 %v713, 4
      %v715 = vand.u32 %v713, 15
      %v716 = vsub.s32 0, %v715
      %v717 = vsel %vm711, %v716, %v715
      %vm718 = vcmp.lt.s32.totalorder %v642, 0
      %v719 = vsub.s32 0, %v642
      %v720 = vsel %vm718, %v719, %v642
      %v721 = vshrl.u32 %v720, 4
      %v722 = vand.u32 %v720, 15
      %v723 = vsub.s32 0, %v722
      %v724 = vsel %vm718, %v723, %v722
      %vm725 = vcmp.lt.s32.totalorder %v643, 0
      %v726 = vsub.s32 0, %v643
      %v727 = vsel %vm725, %v726, %v643
      %v728 = vshrl.u32 %v727, 4
      %v729 = vand.u32 %v727, 15
      %v730 = vsub.s32 0, %v729
      %v731 = vsel %vm725, %v730, %v729
      %vm732 = vcmp.lt.s32.totalorder %v644, 0
      %v733 = vsub.s32 0, %v644
      %v734 = vsel %vm732, %v733, %v644
      %v735 = vshrl.u32 %v734, 4
      %v736 = vand.u32 %v734, 15
      %v737 = vsub.s32 0, %v736
      %v738 = vsel %vm732, %v737, %v736
      %vm739 = vcmp.lt.s32.totalorder %v645, 0
      %v740 = vsub.s32 0, %v645
      %v741 = vsel %vm739, %v740, %v645
      %v742 = vshrl.u32 %v741, 4
      %v743 = vand.u32 %v741, 15
      %v744 = vsub.s32 0, %v743
      %v745 = vsel %vm739, %v744, %v743
      %vm746 = vcmp.lt.s32.totalorder %v646, 0
      %v747 = vsub.s32 0, %v646
      %v748 = vsel %vm746, %v747, %v646
      %v749 = vshrl.u32 %v748, 4
      %v750 = vand.u32 %v748, 15
      %v751 = vsub.s32 0, %v750
      %v752 = vsel %vm746, %v751, %v750
      %vm753 = vcmp.lt.s32.totalorder %v647, 0
      %v754 = vsub.s32 0, %v647
      %v755 = vsel %vm753, %v754, %v647
      %v756 = vshrl.u32 %v755, 4
      %v757 = vand.u32 %v755, 15
      %v758 = vsub.s32 0, %v757
      %v759 = vsel %vm753, %v758, %v757
      %vm760 = vcmp.ne.s32.totalorder %v654, 0
      %vm761 = vcmp.ne.s32.totalorder %v661, 0
      %vm762 = vcmp.ne.s32.totalorder %v668, 0
      %vm763 = vcmp.ne.s32.totalorder %v675, 0
      %vm764 = vcmp.ne.s32.totalorder %v682, 0
      %vm765 = vcmp.ne.s32.totalorder %v689, 0
      %vm766 = vcmp.ne.s32.totalorder %v696, 0
      %vm767 = vcmp.ne.s32.totalorder %v703, 0
      %vm768 = vcmp.ne.s32.totalorder %v710, 0
      %vm769 = vcmp.ne.s32.totalorder %v717, 0
      %vm770 = vcmp.ne.s32.totalorder %v724, 0
      %vm771 = vcmp.ne.s32.totalorder %v731, 0
      %vm772 = vcmp.ne.s32.totalorder %v738, 0
      %vm773 = vcmp.ne.s32.totalorder %v745, 0
      %vm774 = vcmp.ne.s32.totalorder %v752, 0
      %vm775 = vcmp.ne.s32.totalorder %v759, 0
      %vm776 = vcmp.lt.s32.totalorder %v654, 0
      %vm777 = vcmp.lt.s32.totalorder %v661, 0
      %vm778 = vcmp.lt.s32.totalorder %v668, 0
      %vm779 = vcmp.lt.s32.totalorder %v675, 0
      %vm780 = vcmp.lt.s32.totalorder %v682, 0
      %vm781 = vcmp.lt.s32.totalorder %v689, 0
      %vm782 = vcmp.lt.s32.totalorder %v696, 0
      %vm783 = vcmp.lt.s32.totalorder %v703, 0
      %vm784 = vcmp.lt.s32.totalorder %v710, 0
      %vm785 = vcmp.lt.s32.totalorder %v717, 0
      %vm786 = vcmp.lt.s32.totalorder %v724, 0
      %vm787 = vcmp.lt.s32.totalorder %v731, 0
      %vm788 = vcmp.lt.s32.totalorder %v738, 0
      %vm789 = vcmp.lt.s32.totalorder %v745, 0
      %vm790 = vcmp.lt.s32.totalorder %v752, 0
      %vm791 = vcmp.lt.s32.totalorder %v759, 0
      %vm792 = vmand %vm776, %vm760
      %vm793 = vmand %vm777, %vm761
      %vm794 = vmand %vm778, %vm762
      %vm795 = vmand %vm779, %vm763
      %vm796 = vmand %vm780, %vm764
      %vm797 = vmand %vm781, %vm765
      %vm798 = vmand %vm782, %vm766
      %vm799 = vmand %vm783, %vm767
      %vm800 = vmand %vm784, %vm768
      %vm801 = vmand %vm785, %vm769
      %vm802 = vmand %vm786, %vm770
      %vm803 = vmand %vm787, %vm771
      %vm804 = vmand %vm788, %vm772
      %vm805 = vmand %vm789, %vm773
      %vm806 = vmand %vm790, %vm774
      %vm807 = vmand %vm791, %vm775
      %v808 = vadd.s32 %v654, 16
      %v809 = vadd.s32 %v661, 16
      %v810 = vadd.s32 %v668, 16
      %v811 = vadd.s32 %v675, 16
      %v812 = vadd.s32 %v682, 16
      %v813 = vadd.s32 %v689, 16
      %v814 = vadd.s32 %v696, 16
      %v815 = vadd.s32 %v703, 16
      %v816 = vadd.s32 %v710, 16
      %v817 = vadd.s32 %v717, 16
      %v818 = vadd.s32 %v724, 16
      %v819 = vadd.s32 %v731, 16
      %v820 = vadd.s32 %v738, 16
      %v821 = vadd.s32 %v745, 16
      %v822 = vadd.s32 %v752, 16
      %v823 = vadd.s32 %v759, 16
      %v824 = vsel %vm792, %v808, %v654
      %v825 = vsel %vm793, %v809, %v661
      %v826 = vsel %vm794, %v810, %v668
      %v827 = vsel %vm795, %v811, %v675
      %v828 = vsel %vm796, %v812, %v682
      %v829 = vsel %vm797, %v813, %v689
      %v830 = vsel %vm798, %v814, %v696
      %v831 = vsel %vm799, %v815, %v703
      %v832 = vsel %vm800, %v816, %v710
      %v833 = vsel %vm801, %v817, %v717
      %v834 = vsel %vm802, %v818, %v724
      %v835 = vsel %vm803, %v819, %v731
      %v836 = vsel %vm804, %v820, %v738
      %v837 = vsel %vm805, %v821, %v745
      %v838 = vsel %vm806, %v822, %v752
      %v839 = vsel %vm807, %v823, %v759
      %vm856 = vcmask 1040384
      %v857 = vrot.slane %v569, 7
      %v858 = vrot.slane %v572, 7
      %v859 = vsel %vm856, %v857, %v858
      %v860 = vrot.slane %v577, 7
      %v861 = vsel %vm856, %v858, %v860
      %v862 = vrot.slane %v580, 7
      %v863 = vsel %vm856, %v860, %v862
      %v864 = vrot.slane %v585, 7
      %v865 = vsel %vm856, %v862, %v864
      %v866 = vrot.slane %v588, 7
      %v867 = vsel %vm856, %v864, %v866
      %v868 = vrot.slane %v593, 7
      %v869 = vsel %vm856, %v866, %v868
      %v870 = vrot.slane %v596, 7
      %v871 = vsel %vm856, %v868, %v870
      %v872 = vrot.slane %v601, 7
      %v873 = vsel %vm856, %v870, %v872
      %v874 = vrot.slane %v604, 7
      %v875 = vsel %vm856, %v872, %v874
      %v876 = vrot.slane %v609, 7
      %v877 = vsel %vm856, %v874, %v876
      %v878 = vrot.slane %v612, 7
      %v879 = vsel %vm856, %v876, %v878
      %v880 = vrot.slane %v617, 7
      %v881 = vsel %vm856, %v878, %v880
      %v882 = vrot.slane %v620, 7
      %v883 = vsel %vm856, %v880, %v882
      %v884 = vrot.slane %v625, 7
      %v885 = vsel %vm856, %v882, %v884
      %v886 = vrot.slane %v628, 7
      %v887 = vsel %vm856, %v884, %v886
      %v904 = vsel %vm856, 0.0, %v857
      %vm905 = vcmp.eq.s32.totalorder %v824, 0
      %vm906 = vcmp.eq.s32.totalorder %v825, 0
      %vm907 = vcmp.eq.s32.totalorder %v826, 0
      %vm908 = vcmp.eq.s32.totalorder %v827, 0
      %vm909 = vcmp.eq.s32.totalorder %v828, 0
      %vm910 = vcmp.eq.s32.totalorder %v829, 0
      %vm911 = vcmp.eq.s32.totalorder %v830, 0
      %vm912 = vcmp.eq.s32.totalorder %v831, 0
      %vm913 = vcmp.eq.s32.totalorder %v832, 0
      %vm914 = vcmp.eq.s32.totalorder %v833, 0
      %vm915 = vcmp.eq.s32.totalorder %v834, 0
      %vm916 = vcmp.eq.s32.totalorder %v835, 0
      %vm917 = vcmp.eq.s32.totalorder %v836, 0
      %vm918 = vcmp.eq.s32.totalorder %v837, 0
      %vm919 = vcmp.eq.s32.totalorder %v838, 0
      %vm920 = vcmp.eq.s32.totalorder %v839, 0
      %v921 = vsel %vm905, 0.0, %v904
      %v922 = vsel %vm906, 0.0, %v859
      %v923 = vsel %vm907, 0.0, %v861
      %v924 = vsel %vm908, 0.0, %v863
      %v925 = vsel %vm909, 0.0, %v865
      %v926 = vsel %vm910, 0.0, %v867
      %v927 = vsel %vm911, 0.0, %v869
      %v928 = vsel %vm912, 0.0, %v871
      %v929 = vsel %vm913, 0.0, %v873
      %v930 = vsel %vm914, 0.0, %v875
      %v931 = vsel %vm915, 0.0, %v877
      %v932 = vsel %vm916, 0.0, %v879
      %v933 = vsel %vm917, 0.0, %v881
      %v934 = vsel %vm918, 0.0, %v883
      %v935 = vsel %vm919, 0.0, %v885
      %v936 = vsel %vm920, 0.0, %v887
      %vm937 = vcmask 1046528
      %v938 = vrot.slane %v569, 1
      %v939 = vrot.slane %v572, 1
      %v940 = vsel %vm937, %v938, %v939
      %v941 = vrot.slane %v577, 1
      %v942 = vsel %vm937, %v939, %v941
      %v943 = vrot.slane %v580, 1
      %v944 = vsel %vm937, %v941, %v943
      %v945 = vrot.slane %v585, 1
      %v946 = vsel %vm937, %v943, %v945
      %v947 = vrot.slane %v588, 1
      %v948 = vsel %vm937, %v945, %v947
      %v949 = vrot.slane %v593, 1
      %v950 = vsel %vm937, %v947, %v949
      %v951 = vrot.slane %v596, 1
      %v952 = vsel %vm937, %v949, %v951
      %v953 = vrot.slane %v601, 1
      %v954 = vsel %vm937, %v951, %v953
      %v955 = vrot.slane %v604, 1
      %v956 = vsel %vm937, %v953, %v955
      %v957 = vrot.slane %v609, 1
      %v958 = vsel %vm937, %v955, %v957
      %v959 = vrot.slane %v612, 1
      %v960 = vsel %vm937, %v957, %v959
      %v961 = vrot.slane %v617, 1
      %v962 = vsel %vm937, %v959, %v961
      %v963 = vrot.slane %v620, 1
      %v964 = vsel %vm937, %v961, %v963
      %v965 = vrot.slane %v625, 1
      %v966 = vsel %vm937, %v963, %v965
      %v967 = vrot.slane %v628, 1
      %v968 = vsel %vm937, %v965, %v967
      %v985 = vsel %vm937, %v967, 0.0
      %vm986 = vcmp.eq.s32.totalorder %v824, 15
      %vm987 = vcmp.eq.s32.totalorder %v825, 15
      %vm988 = vcmp.eq.s32.totalorder %v826, 15
      %vm989 = vcmp.eq.s32.totalorder %v827, 15
      %vm990 = vcmp.eq.s32.totalorder %v828, 15
      %vm991 = vcmp.eq.s32.totalorder %v829, 15
      %vm992 = vcmp.eq.s32.totalorder %v830, 15
      %vm993 = vcmp.eq.s32.totalorder %v831, 15
      %vm994 = vcmp.eq.s32.totalorder %v832, 15
      %vm995 = vcmp.eq.s32.totalorder %v833, 15
      %vm996 = vcmp.eq.s32.totalorder %v834, 15
      %vm997 = vcmp.eq.s32.totalorder %v835, 15
      %vm998 = vcmp.eq.s32.totalorder %v836, 15
      %vm999 = vcmp.eq.s32.totalorder %v837, 15
      %vm1000 = vcmp.eq.s32.totalorder %v838, 15
      %vm1001 = vcmp.eq.s32.totalorder %v839, 15
      %v1002 = vsel %vm986, 0.0, %v940
      %v1003 = vsel %vm987, 0.0, %v942
      %v1004 = vsel %vm988, 0.0, %v944
      %v1005 = vsel %vm989, 0.0, %v946
      %v1006 = vsel %vm990, 0.0, %v948
      %v1007 = vsel %vm991, 0.0, %v950
      %v1008 = vsel %vm992, 0.0, %v952
      %v1009 = vsel %vm993, 0.0, %v954
      %v1010 = vsel %vm994, 0.0, %v956
      %v1011 = vsel %vm995, 0.0, %v958
      %v1012 = vsel %vm996, 0.0, %v960
      %v1013 = vsel %vm997, 0.0, %v962
      %v1014 = vsel %vm998, 0.0, %v964
      %v1015 = vsel %vm999, 0.0, %v966
      %v1016 = vsel %vm1000, 0.0, %v968
      %v1017 = vsel %vm1001, 0.0, %v985
      %1034 = vrot.lane.b32.xlu0 %v921, 4
      %v1035 = vpop.permute.xlu0 %1034
      %1036 = vrot.lane.b32.xlu0 %v922, 4
      %v1037 = vpop.permute.xlu0 %1036
      %1038 = vrot.lane.b32.xlu0 %v923, 4
      %v1039 = vpop.permute.xlu0 %1038
      %1040 = vrot.lane.b32.xlu0 %v924, 4
      %v1041 = vpop.permute.xlu0 %1040
      %1042 = vrot.lane.b32.xlu0 %v925, 4
      %v1043 = vpop.permute.xlu0 %1042
      %1044 = vrot.lane.b32.xlu0 %v926, 4
      %v1045 = vpop.permute.xlu0 %1044
      %1046 = vrot.lane.b32.xlu0 %v927, 4
      %v1047 = vpop.permute.xlu0 %1046
      %1048 = vrot.lane.b32.xlu0 %v928, 4
      %v1049 = vpop.permute.xlu0 %1048
      %1050 = vrot.lane.b32.xlu0 %v929, 4
      %v1051 = vpop.permute.xlu0 %1050
      %1052 = vrot.lane.b32.xlu0 %v930, 4
      %v1053 = vpop.permute.xlu0 %1052
      %1054 = vrot.lane.b32.xlu0 %v931, 4
      %v1055 = vpop.permute.xlu0 %1054
      %1056 = vrot.lane.b32.xlu0 %v932, 4
      %v1057 = vpop.permute.xlu0 %1056
      %1058 = vrot.lane.b32.xlu0 %v933, 4
      %v1059 = vpop.permute.xlu0 %1058
      %1060 = vrot.lane.b32.xlu0 %v934, 4
      %v1061 = vpop.permute.xlu0 %1060
      %1062 = vrot.lane.b32.xlu0 %v935, 4
      %v1063 = vpop.permute.xlu0 %1062
      %1064 = vrot.lane.b32.xlu0 %v936, 4
      %v1065 = vpop.permute.xlu0 %1064
      %v1082 = vadd.f32 %v569, %v1035
      %v1083 = vadd.f32 %v572, %v1037
      %v1084 = vadd.f32 %v577, %v1039
      %v1085 = vadd.f32 %v580, %v1041
      %v1086 = vadd.f32 %v585, %v1043
      %v1087 = vadd.f32 %v588, %v1045
      %v1088 = vadd.f32 %v593, %v1047
      %v1089 = vadd.f32 %v596, %v1049
      %v1090 = vadd.f32 %v601, %v1051
      %v1091 = vadd.f32 %v604, %v1053
      %v1092 = vadd.f32 %v609, %v1055
      %v1093 = vadd.f32 %v612, %v1057
      %v1094 = vadd.f32 %v617, %v1059
      %v1095 = vadd.f32 %v620, %v1061
      %v1096 = vadd.f32 %v625, %v1063
      %v1097 = vadd.f32 %v628, %v1065
      %1114 = vrot.lane.b32.xlu0 %v1002, 124
      %v1115 = vpop.permute.xlu0 %1114
      %1116 = vrot.lane.b32.xlu0 %v1003, 124
      %v1117 = vpop.permute.xlu0 %1116
      %1118 = vrot.lane.b32.xlu0 %v1004, 124
      %v1119 = vpop.permute.xlu0 %1118
      %1120 = vrot.lane.b32.xlu0 %v1005, 124
      %v1121 = vpop.permute.xlu0 %1120
      %1122 = vrot.lane.b32.xlu0 %v1006, 124
      %v1123 = vpop.permute.xlu0 %1122
      %1124 = vrot.lane.b32.xlu0 %v1007, 124
      %v1125 = vpop.permute.xlu0 %1124
      %1126 = vrot.lane.b32.xlu0 %v1008, 124
      %v1127 = vpop.permute.xlu0 %1126
      %1128 = vrot.lane.b32.xlu0 %v1009, 124
      %v1129 = vpop.permute.xlu0 %1128
      %1130 = vrot.lane.b32.xlu0 %v1010, 124
      %v1131 = vpop.permute.xlu0 %1130
      %1132 = vrot.lane.b32.xlu0 %v1011, 124
      %v1133 = vpop.permute.xlu0 %1132
      %1134 = vrot.lane.b32.xlu0 %v1012, 124
      %v1135 = vpop.permute.xlu0 %1134
      %1136 = vrot.lane.b32.xlu0 %v1013, 124
      %v1137 = vpop.permute.xlu0 %1136
      %1138 = vrot.lane.b32.xlu0 %v1014, 124
      %v1139 = vpop.permute.xlu0 %1138
      %1140 = vrot.lane.b32.xlu0 %v1015, 124
      %v1141 = vpop.permute.xlu0 %1140
      %1142 = vrot.lane.b32.xlu0 %v1016, 124
      %v1143 = vpop.permute.xlu0 %1142
      %1144 = vrot.lane.b32.xlu0 %v1017, 124
      %v1145 = vpop.permute.xlu0 %1144
      %v1162 = vadd.f32 %v1082, %v1115
      %v1163 = vadd.f32 %v1083, %v1117
      %v1164 = vadd.f32 %v1084, %v1119
      %v1165 = vadd.f32 %v1085, %v1121
      %v1166 = vadd.f32 %v1086, %v1123
      %v1167 = vadd.f32 %v1087, %v1125
      %v1168 = vadd.f32 %v1088, %v1127
      %v1169 = vadd.f32 %v1089, %v1129
      %v1170 = vadd.f32 %v1090, %v1131
      %v1171 = vadd.f32 %v1091, %v1133
      %v1172 = vadd.f32 %v1092, %v1135
      %v1173 = vadd.f32 %v1093, %v1137
      %v1174 = vadd.f32 %v1094, %v1139
      %v1175 = vadd.f32 %v1095, %v1141
      %v1176 = vadd.f32 %v1096, %v1143
      %v1177 = vadd.f32 %v1097, %v1145
      %v1178 = vld [vmem:[%s4] sm:$0x1]
      %v1180 = vlaneseq
      %v1181 = vshrl.u32 %v1180, 7
      %v1182 = vsub.s32 0, %v1181
      %v1183 = vrot.slane %v1178, %v1182
      %1184 = vrot.lane.b32.xlu0 %v1183, 4
      %v1185 = vpop.permute.xlu0 %1184
      %v1187 = vadd.f32 %v1162, %v1185
      %v1188 = vadd.f32 %v1163, %v1185
      %v1189 = vadd.f32 %v1164, %v1185
      %v1190 = vadd.f32 %v1165, %v1185
      %v1191 = vadd.f32 %v1166, %v1185
      %v1192 = vadd.f32 %v1167, %v1185
      %v1193 = vadd.f32 %v1168, %v1185
      %v1194 = vadd.f32 %v1169, %v1185
      %v1195 = vadd.f32 %v1170, %v1185
      %v1196 = vadd.f32 %v1171, %v1185
      %v1197 = vadd.f32 %v1172, %v1185
      %v1198 = vadd.f32 %v1173, %v1185
      %v1199 = vadd.f32 %v1174, %v1185
      %v1200 = vadd.f32 %v1175, %v1185
      %v1201 = vadd.f32 %v1176, %v1185
      %v1202 = vadd.f32 %v1177, %v1185
      %v1203 = vmax.f32 %v1187, 0.0
      %v1204 = vmax.f32 %v1188, 0.0
      %v1205 = vmax.f32 %v1189, 0.0
      %v1206 = vmax.f32 %v1190, 0.0
      %v1207 = vmax.f32 %v1191, 0.0
      %v1208 = vmax.f32 %v1192, 0.0
      %v1209 = vmax.f32 %v1193, 0.0
      %v1210 = vmax.f32 %v1194, 0.0
      %v1211 = vmax.f32 %v1195, 0.0
      %v1212 = vmax.f32 %v1196, 0.0
      %v1213 = vmax.f32 %v1197, 0.0
      %v1214 = vmax.f32 %v1198, 0.0
      %v1215 = vmax.f32 %v1199, 0.0
      %v1216 = vmax.f32 %v1200, 0.0
      %v1217 = vmax.f32 %v1201, 0.0
      %v1218 = vmax.f32 %v1202, 0.0
      %v1219 = vpack.c.bf16 %v1204, %v1203
      %v1220 = vpack.c.bf16 %v1206, %v1205
      %v1221 = vpack.c.bf16 %v1208, %v1207
      %v1222 = vpack.c.bf16 %v1210, %v1209
      %v1223 = vpack.c.bf16 %v1212, %v1211
      %v1224 = vpack.c.bf16 %v1214, %v1213
      %v1225 = vpack.c.bf16 %v1216, %v1215
      %v1226 = vpack.c.bf16 %v1218, %v1217
      %v1227 = vld [vmem:[%s5] sm:$0x3]
      %v1228 = vld [vmem:[%s6] sm:$0x1]
      %v1230 = vlaneseq
      %v1231 = vshrl.u32 %v1230, 7
      %v1232 = vsub.s32 0, %v1231
      %v1233 = vrot.slane %v1228, %v1232
      %1243 = vrot.lane.b32.xlu0 %v1219, 124
      %v1244 = vpop.permute.xlu0 %1243
      %1245 = vrot.lane.b32.xlu0 %v1220, 124
      %v1246 = vpop.permute.xlu0 %1245
      %1247 = vrot.lane.b32.xlu0 %v1221, 124
      %v1248 = vpop.permute.xlu0 %1247
      %1249 = vrot.lane.b32.xlu0 %v1222, 124
      %v1250 = vpop.permute.xlu0 %1249
      %1251 = vrot.lane.b32.xlu0 %v1223, 124
      %v1252 = vpop.permute.xlu0 %1251
      %1253 = vrot.lane.b32.xlu0 %v1224, 124
      %v1254 = vpop.permute.xlu0 %1253
      %1255 = vrot.lane.b32.xlu0 %v1225, 124
      %v1256 = vpop.permute.xlu0 %1255
      %1257 = vrot.lane.b32.xlu0 %v1226, 124
      %v1258 = vpop.permute.xlu0 %1257
      %v1260 = vsel %vm505, %v1244, 0
      %v1263 = vsel %vm505, %v1246, 0
      %v1266 = vsel %vm505, %v1248, 0
      %v1269 = vsel %vm505, %v1250, 0
      %v1272 = vsel %vm505, %v1252, 0
      %v1275 = vsel %vm505, %v1254, 0
      %v1278 = vsel %vm505, %v1256, 0
      %v1281 = vsel %vm505, %v1258, 0
      %v1284 = vsel %vm530, %v1227, 0
      %1286 = vmatprep.subr.bf16.mxu0 0
      %1287 = vmatpush1.bf16.msra.mxu0 0
      %1288 = vmatprep.subr.bf16.mxu0 0
      %1289 = vmatpush1.bf16.msra.mxu0 0
      %1290 = vmatprep.subr.bf16.mxu0 0
      %1291 = vmatpush1.bf16.msra.mxu0 0
      %1292 = vmatprep.subr.bf16.mxu0 0
      %1293 = vmatpush1.bf16.msra.mxu0 0
      %1294 = vmatprep.subr.bf16.mxu0 0
      %1295 = vmatpush1.bf16.msra.mxu0 0
      %1296 = vmatprep.subr.bf16.mxu0 0
      %1297 = vmatpush1.bf16.msra.mxu0 0
      %1298 = vmatprep.subr.bf16.mxu0 0
      %1299 = vmatpush1.bf16.msra.mxu0 0
      %1300 = vmatprep.subr.bf16.mxu0 0
      %1301 = vmatpush1.bf16.msra.mxu0 %v1284
      %1302 = vmatprep.subr.bf16.mxu0 0
      %1303 = vmatpush2.bf16.msra.mxu0 0
      %1304 = vmatprep.subr.bf16.mxu0 0
      %1305 = vmatpush2.bf16.msra.mxu0 0
      %1306 = vmatprep.subr.bf16.mxu0 0
      %1307 = vmatpush2.bf16.msra.mxu0 0
      %1308 = vmatprep.subr.bf16.mxu0 0
      %1309 = vmatpush2.bf16.msra.mxu0 0
      %1310 = vmatprep.subr.bf16.mxu0 0
      %1311 = vmatpush2.bf16.msra.mxu0 0
      %1312 = vmatprep.subr.bf16.mxu0 0
      %1313 = vmatpush2.bf16.msra.mxu0 0
      %1314 = vmatprep.subr.bf16.mxu0 0
      %1315 = vmatpush2.bf16.msra.mxu0 0
      %1316 = vmatprep.subr.bf16.mxu0 0
      %1317 = vmatpush2.bf16.msra.mxu0 0
      %1318 = vmatprep.mubr.bf16.mxu0 0
      %1319 = vmatmul.mubr.bf16.gmra.mxu0 %v1260
      %v1320 = vpop.f32.mrf.mxu0
      %v1321 = vadd.f32 %v1233, %v1320
      %v1322 = vpop.f32.mrf.mxu0
      %v1323 = vpop.f32.mrf.mxu0
      %v1324 = vadd.f32 %v1233, %v1323
      %v1325 = vpop.f32.mrf.mxu0
      %1326 = vmatprep.mubr.bf16.mxu0 0
      %1327 = vmatmul.mubr.bf16.gmra.mxu0 %v1263
      %v1328 = vpop.f32.mrf.mxu0
      %v1329 = vadd.f32 %v1233, %v1328
      %v1330 = vpop.f32.mrf.mxu0
      %v1331 = vpop.f32.mrf.mxu0
      %v1332 = vadd.f32 %v1233, %v1331
      %v1333 = vpop.f32.mrf.mxu0
      %1334 = vmatprep.mubr.bf16.mxu0 0
      %1335 = vmatmul.mubr.bf16.gmra.mxu0 %v1266
      %v1336 = vpop.f32.mrf.mxu0
      %v1337 = vadd.f32 %v1233, %v1336
      %v1338 = vpop.f32.mrf.mxu0
      %v1339 = vpop.f32.mrf.mxu0
      %v1340 = vadd.f32 %v1233, %v1339
      %v1341 = vpop.f32.mrf.mxu0
      %1342 = vmatprep.mubr.bf16.mxu0 0
      %1343 = vmatmul.mubr.bf16.gmra.mxu0 %v1269
      %v1344 = vpop.f32.mrf.mxu0
      %v1345 = vadd.f32 %v1233, %v1344
      %v1346 = vpop.f32.mrf.mxu0
      %v1347 = vpop.f32.mrf.mxu0
      %v1348 = vadd.f32 %v1233, %v1347
      %v1349 = vpop.f32.mrf.mxu0
      %1350 = vmatprep.mubr.bf16.mxu0 0
      %1351 = vmatmul.mubr.bf16.gmra.mxu0 %v1272
      %v1352 = vpop.f32.mrf.mxu0
      %v1353 = vadd.f32 %v1233, %v1352
      %v1354 = vpop.f32.mrf.mxu0
      %v1355 = vpop.f32.mrf.mxu0
      %v1356 = vadd.f32 %v1233, %v1355
      %v1357 = vpop.f32.mrf.mxu0
      %1358 = vmatprep.mubr.bf16.mxu0 0
      %1359 = vmatmul.mubr.bf16.gmra.mxu0 %v1275
      %v1360 = vpop.f32.mrf.mxu0
      %v1361 = vadd.f32 %v1233, %v1360
      %v1362 = vpop.f32.mrf.mxu0
      %v1363 = vpop.f32.mrf.mxu0
      %v1364 = vadd.f32 %v1233, %v1363
      %v1365 = vpop.f32.mrf.mxu0
      %1366 = vmatprep.mubr.bf16.mxu0 0
      %1367 = vmatmul.mubr.bf16.gmra.mxu0 %v1278
      %v1368 = vpop.f32.mrf.mxu0
      %v1369 = vadd.f32 %v1233, %v1368
      %v1370 = vpop.f32.mrf.mxu0
      %v1371 = vpop.f32.mrf.mxu0
      %v1372 = vadd.f32 %v1233, %v1371
      %v1373 = vpop.f32.mrf.mxu0
      %1374 = vmatprep.mubr.bf16.mxu0 0
      %1375 = vmatmul.mubr.bf16.gmra.mxu0 %v1281
      %v1376 = vpop.f32.mrf.mxu0
      %v1377 = vadd.f32 %v1233, %v1376
      %v1378 = vpop.f32.mrf.mxu0
      %v1379 = vpop.f32.mrf.mxu0
      %v1380 = vadd.f32 %v1233, %v1379
      %v1381 = vpop.f32.mrf.mxu0
      %1382 = vdwg.mxu0
      %v1383 = vadd.f32 %v1321, %v319
      %v1384 = vadd.f32 %v1324, %v320
      %v1385 = vadd.f32 %v1329, %v321
      %v1386 = vadd.f32 %v1332, %v322
      %v1387 = vadd.f32 %v1337, %v323
      %v1388 = vadd.f32 %v1340, %v324
      %v1389 = vadd.f32 %v1345, %v325
      %v1390 = vadd.f32 %v1348, %v326
      %v1391 = vadd.f32 %v1353, %v327
      %v1392 = vadd.f32 %v1356, %v328
      %v1393 = vadd.f32 %v1361, %v329
      %v1394 = vadd.f32 %v1364, %v330
      %v1395 = vadd.f32 %v1369, %v331
      %v1396 = vadd.f32 %v1372, %v332
      %v1397 = vadd.f32 %v1377, %v333
      %v1398 = vadd.f32 %v1380, %v334
      %v1399 = vmax.f32 %v1383, 0.0
      %v1400 = vmax.f32 %v1384, 0.0
      %v1401 = vmax.f32 %v1385, 0.0
      %v1402 = vmax.f32 %v1386, 0.0
      %v1403 = vmax.f32 %v1387, 0.0
      %v1404 = vmax.f32 %v1388, 0.0
      %v1405 = vmax.f32 %v1389, 0.0
      %v1406 = vmax.f32 %v1390, 0.0
      %v1407 = vmax.f32 %v1391, 0.0
      %v1408 = vmax.f32 %v1392, 0.0
      %v1409 = vmax.f32 %v1393, 0.0
      %v1410 = vmax.f32 %v1394, 0.0
      %v1411 = vmax.f32 %v1395, 0.0
      %v1412 = vmax.f32 %v1396, 0.0
      %v1413 = vmax.f32 %v1397, 0.0
      %v1414 = vmax.f32 %v1398, 0.0
      %1415 = vst.msk [vmem:[%s316] sm:$0xff] %vm358, %v1399
      %1416 = vst.msk [vmem:[%s316 + $0x8] sm:$0xff] %vm358, %v1400
      %1417 = vst.msk [vmem:[%s316 + $0x10] sm:$0xff] %vm358, %v1401
      %1418 = vst.msk [vmem:[%s316 + $0x18] sm:$0xff] %vm358, %v1402
      %1419 = vst.msk [vmem:[%s316 + $0x20] sm:$0xff] %vm358, %v1403
      %1420 = vst.msk [vmem:[%s316 + $0x28] sm:$0xff] %vm358, %v1404
      %1421 = vst.msk [vmem:[%s316 + $0x30] sm:$0xff] %vm358, %v1405
      %1422 = vst.msk [vmem:[%s316 + $0x38] sm:$0xff] %vm358, %v1406
      %1423 = vst.msk [vmem:[%s316 + $0x40] sm:$0xff] %vm358, %v1407
      %1424 = vst.msk [vmem:[%s316 + $0x48] sm:$0xff] %vm358, %v1408
      %1425 = vst.msk [vmem:[%s316 + $0x50] sm:$0xff] %vm358, %v1409
      %1426 = vst.msk [vmem:[%s316 + $0x58] sm:$0xff] %vm358, %v1410
      %1427 = vst.msk [vmem:[%s316 + $0x60] sm:$0xff] %vm358, %v1411
      %1428 = vst.msk [vmem:[%s316 + $0x68] sm:$0xff] %vm358, %v1412
      %1429 = vst.msk [vmem:[%s316 + $0x70] sm:$0xff] %vm358, %v1413
      %1430 = vst.msk [vmem:[%s316 + $0x78] sm:$0xff] %vm358, %v1414
      %s1431 = smul.u32 16, %s23
      %p1432 = scmp.lt.s32.totalorder %s22, 1
      %s1433 = scalar_select %p1432, %s22, 1
      %p1434 = scmp.lt.s32.totalorder %s1431, 31
      %s1435 = scalar_select %p1434, %s1431, 31
      %s1436 = smul.addr %s1433, 32
      %s1437 = sadd.s32 %s1435, %s1436
      %s1438 = smul.addr %s1437, 8
      %s1439 = scalar_lea.vmem %s7, %s1438
      // Predicated region
      $region49: #{tpu_custom_call.1} parent=47 // pred_check
        %p1440 = pneg %p204
      $region50: #{tpu_custom_call.1} parent=47 // pred_check_branch
        %1442 = sbr.rel (%p1440) target = $region52
      $region51: #{tpu_custom_call.1} parent=47 // pred_region
        %s1443 = smul.u32 16, %s23
      $region52: #{tpu_custom_call.1} parent=47 // pred_fallthru
        _
    $region48: #{tpu_custom_call.1} parent=5 // pred_fallthru
      _
    %p1444 = scmp.le.s32.totalorder 2, %s13
    // Predicated region
    $region53: #{tpu_custom_call.1} parent=5 // pred_check
      %p1445 = pneg %p1444
    $region54: #{tpu_custom_call.1} parent=5 // pred_check_branch
      %1447 = sbr.rel (%p1445) target = $region56
    $region55: #{tpu_custom_call.1} parent=5 // pred_region
      %s1448 = ssub.s32 %s13, 2
      // Predicated region
      $region57: #{tpu_custom_call.1} parent=55 // pred_check
        %p1449 = pneg %p210
      $region58: #{tpu_custom_call.1} parent=55 // pred_check_branch
        %1451 = sbr.rel (%p1449) target = $region60
      $region59: #{tpu_custom_call.1} parent=55 // pred_region
        %s1452 = smul.u32 16, %s25
        %p1453 = scmp.lt.s32.totalorder %s24, 1
        %s1454 = scalar_select %p1453, %s24, 1
        %p1455 = scmp.lt.s32.totalorder %s1452, 31
        %s1456 = scalar_select %p1455, %s1452, 31
        %s1457 = smul.addr %s1454, 32
        %s1458 = sadd.s32 %s1456, %s1457
        %s1459 = smul.addr %s1458, 8
        %s1460 = scalar_lea.vmem %s7, %s1459
      $region60: #{tpu_custom_call.1} parent=55 // pred_fallthru
        _
    $region56: #{tpu_custom_call.1} parent=5 // pred_fallthru
      _
  $region6: #{tpu_custom_call.1} parent=0 // loop_footer
    %s17 = sadd.s32 1, %s13
  $region7: #{tpu_custom_call.1} parent=0 // loop_footer_branch
    %12 = sbr.rel target = $region3
  $region8: #{tpu_custom_call.1} parent=0 // loop_exit
    _

</llo_original>
